<compile_context>
chip_gen: v5e
topology: v5e:2x2
jax: 0.10.0
libtpu: 0.0.40
codegen_flags: <defaults>
</compile_context>

<pallas_src>
import functools

import jax
import jax.numpy as jnp
from jax.experimental import pallas as pl
from jax.experimental.pallas import tpu as pltpu

NUM_LAYERS = 3
HIDDEN = 128      # lstm_size
EMBED = 128       # embedding_dim


def _sigmoid(x):
    # sigmoid(x) = 0.5 * (tanh(x/2) + 1): single EUP op, no f32 divide.
    return 0.5 * (jnp.tanh(0.5 * x) + 1.0)


def _lstm_cell(gates, c_prev):
    # PyTorch gate order: i, f, g, o
    i = _sigmoid(gates[:, 0 * HIDDEN:1 * HIDDEN])
    f = _sigmoid(gates[:, 1 * HIDDEN:2 * HIDDEN])
    g = jnp.tanh(gates[:, 2 * HIDDEN:3 * HIDDEN])
    o = _sigmoid(gates[:, 3 * HIDDEN:4 * HIDDEN])
    c_new = f * c_prev + i * g
    h_new = o * jnp.tanh(c_new)
    return h_new, c_new


# ----------------------------------------------------------------------------
# Batched matmul + bias: bf16 operands, f32 accumulation, 2-D parallel grid
# (rows x output-columns).  Used for the hoisted layer-0 input projection and
# the hoisted final FC.
# ----------------------------------------------------------------------------
def _matmul_bias_kernel(x_ref, w_ref, b_ref, out_ref):
    out_ref[...] = (jnp.dot(x_ref[...], w_ref[...],
                            preferred_element_type=jnp.float32)
                    + b_ref[...]).astype(out_ref.dtype)


def matmul_bias(x2d, w, b):
    """(M, K) @ (K, Nf) + b(1, Nf) -> f32, bf16 MXU operands.

    Rows padded to an MXU-shaped tile; output columns tiled at <=512 so the
    weight / output VMEM blocks stay ~<1 MiB even for a huge vocab (v7x-safe),
    with lane-dense stores.
    """
    M, K = x2d.shape
    Nf = w.shape[1]
    x2d = x2d.astype(jnp.bfloat16)
    w = w.astype(jnp.bfloat16)
    b = b.astype(jnp.float32)

    # Column tiling (lane-dense, multiple of 128, capped at 512).
    tile_n = min(512, -(-Nf // 128) * 128)
    Np = -(-Nf // tile_n) * tile_n
    if Np != Nf:
        w = jnp.pad(w, ((0, 0), (0, Np - Nf)))
        b = jnp.pad(b, ((0, 0), (0, Np - Nf)))

    # Row tiling: MXU-shaped 256 when there is enough work, else one padded tile.
    tile_m = 256 if M >= 256 else -(-M // 8) * 8
    Mp = -(-M // tile_m) * tile_m
    if Mp != M:
        x2d = jnp.pad(x2d, ((0, Mp - M), (0, 0)))

    out = pl.pallas_call(
        _matmul_bias_kernel,
        out_shape=jax.ShapeDtypeStruct((Mp, Np), jnp.float32),
        grid_spec=pltpu.PrefetchScalarGridSpec(
            num_scalar_prefetch=0,
            grid=(Mp // tile_m, Np // tile_n),
            in_specs=[
                pl.BlockSpec((tile_m, K), lambda i, j: (i, 0)),
                pl.BlockSpec((K, tile_n), lambda i, j: (0, j)),
                pl.BlockSpec((1, tile_n), lambda i, j: (0, j)),
            ],
            out_specs=pl.BlockSpec((tile_m, tile_n), lambda i, j: (i, j)),
        ),
        compiler_params=pltpu.CompilerParams(
            dimension_semantics=("parallel", "parallel")),
    )(x2d, w, b)
    return out[:M, :Nf]


# ----------------------------------------------------------------------------
# Sequential recurrent kernel: grid over blocks of TB time steps.
# ----------------------------------------------------------------------------
def lstm_recurrent_kernel(gates0_ref, w_hh0_ref, w_ih_ref, w_hh_ref, b_ref,
                          h0_ref, c0_ref,
                          h_top_ref, hN_ref, cN_ref,
                          *, time_block, n_steps, masked):
    tb = pl.program_id(0)
    T = h_top_ref.shape[1]

    # hN/cN output blocks are resident (constant index_map) => they ARE the
    # recurrent state.  Initialize once, update in place.
    @pl.when(tb == 0)
    def _():
        hN_ref[...] = h0_ref[...]
        cN_ref[...] = c0_ref[...]

    # Load state into locals ONCE per grid step: bf16 h (MXU operand), f32 c.
    h = [hN_ref[l].astype(jnp.bfloat16) for l in range(NUM_LAYERS)]
    c = [cN_ref[l] for l in range(NUM_LAYERS)]

    # Hoist bias broadcasts out of the unrolled time loop (no CSE of
    # broadcast_in_dim): one (T, 4H) slab per upper layer per grid step.
    bias = [jnp.broadcast_to(b_ref[l], (T, 4 * HIDDEN))
            for l in range(NUM_LAYERS - 1)]

    for k in range(time_block):
        valid = (tb * time_block + k) < n_steps if masked else None

        # ---- layer 0: input projection precomputed outside; only the
        #      recurrent (T,H)@(H,4H) bf16 matmul sits on the serial path.
        gates = gates0_ref[k] + jnp.dot(h[0], w_hh0_ref[...],
                                        preferred_element_type=jnp.float32)
        h_new, c_new = _lstm_cell(gates, c[0])
        if masked:
            h_new = jnp.where(valid, h_new, h[0].astype(jnp.float32))
            c_new = jnp.where(valid, c_new, c[0])
        h[0] = h_new.astype(jnp.bfloat16)
        c[0] = c_new
        x = h[0]

        # ---- layers 1..L-1: two accumulated K=128 bf16 dots (no VMEM staging).
        for layer in range(1, NUM_LAYERS):
            gates = (jnp.dot(x, w_ih_ref[layer - 1],
                             preferred_element_type=jnp.float32)
                     + jnp.dot(h[layer], w_hh_ref[layer - 1],
                               preferred_element_type=jnp.float32)
                     + bias[layer - 1])
            h_new, c_new = _lstm_cell(gates, c[layer])
            if masked:
                h_new = jnp.where(valid, h_new, h[layer].astype(jnp.float32))
                c_new = jnp.where(valid, c_new, c[layer])
            h[layer] = h_new.astype(jnp.bfloat16)
            c[layer] = c_new
            x = h[layer]

        # Top-layer hidden for this step; final FC is applied outside, batched.
        h_top_ref[k] = x

    # Write the carried state back ONCE per grid step.
    for l in range(NUM_LAYERS):
        hN_ref[l] = h[l].astype(jnp.float32)
        cN_ref[l] = c[l]


def _pick_time_block(n):
    # Large TB amortizes ~0.35us per-grid-step overhead on the sequential axis.
    if n <= 16:
        return n
    for t in range(16, 7, -1):
        if n % t == 0:
            return t
    return 16  # pad + mask the tail


def lstm_model_forward(x, prev_state, params, sequence_length):
    """Pallas implementation of LSTMModel.forward (eval mode).

    x: (N, L) int32 token indices; padded/truncated along axis 1 to
       sequence_length (same as the PyTorch forward).
    prev_state: (h0, c0), each (NUM_LAYERS, sequence_length, HIDDEN) f32.
    Returns (logits, (hN, cN)).
    """
    h0, c0 = prev_state
    N, L = x.shape
    T = sequence_length
    if L < T:
        x = jnp.pad(x, ((0, 0), (T - L, 0)))
    elif L > T:
        x = x[:, -T:]

    # Embedding gather: plain-JAX glue (no clean dense-Pallas equivalent).
    embed = jnp.take(params["embedding"], x, axis=0).astype(jnp.float32)  # (N,T,E)

    # Hoisted layer-0 input projection: batched over all N*T rows, parallel grid.
    gates0 = matmul_bias(embed.reshape(N * T, EMBED),
                         params["w_ih0_t"], params["b0"])
    gates0 = gates0.reshape(N, T, 4 * HIDDEN)

    TB = _pick_time_block(N)
    N_pad = -(-N // TB) * TB
    masked = N_pad != N
    if masked:
        gates0 = jnp.pad(gates0, ((0, N_pad - N), (0, 0), (0, 0)))

    kernel = functools.partial(lstm_recurrent_kernel, time_block=TB,
                               n_steps=N, masked=masked)

    out_shapes = (
        jax.ShapeDtypeStruct((N_pad, T, HIDDEN), jnp.bfloat16),          # h_top
        jax.ShapeDtypeStruct((NUM_LAYERS, T, HIDDEN), jnp.float32),      # hN
        jax.ShapeDtypeStruct((NUM_LAYERS, T, HIDDEN), jnp.float32),      # cN
    )

    h_top, hN, cN = pl.pallas_call(
        kernel,
        out_shape=out_shapes,
        grid_spec=pltpu.PrefetchScalarGridSpec(
            num_scalar_prefetch=0,
            grid=(N_pad // TB,),
            in_specs=[
                pl.BlockSpec((TB, T, 4 * HIDDEN), lambda i: (i, 0, 0)),   # gates0
                pl.BlockSpec((HIDDEN, 4 * HIDDEN), lambda i: (0, 0)),     # w_hh0_t
                pl.BlockSpec((NUM_LAYERS - 1, HIDDEN, 4 * HIDDEN),
                             lambda i: (0, 0, 0)),                        # w_ih 1..2
                pl.BlockSpec((NUM_LAYERS - 1, HIDDEN, 4 * HIDDEN),
                             lambda i: (0, 0, 0)),                        # w_hh 1..2
                pl.BlockSpec((NUM_LAYERS - 1, 1, 4 * HIDDEN),
                             lambda i: (0, 0, 0)),                        # b 1..2
                pl.BlockSpec((NUM_LAYERS, T, HIDDEN), lambda i: (0, 0, 0)),  # h0
                pl.BlockSpec((NUM_LAYERS, T, HIDDEN), lambda i: (0, 0, 0)),  # c0
            ],
            out_specs=[
                pl.BlockSpec((TB, T, HIDDEN), lambda i: (i, 0, 0)),          # h_top
                pl.BlockSpec((NUM_LAYERS, T, HIDDEN), lambda i: (0, 0, 0)),  # hN
                pl.BlockSpec((NUM_LAYERS, T, HIDDEN), lambda i: (0, 0, 0)),  # cN
            ],
        ),
        compiler_params=pltpu.CompilerParams(
            dimension_semantics=("arbitrary",)),
    )(gates0, params["w_hh0_t"], params["w_ih_t"], params["w_hh_t"],
      params["b_hi"], h0, c0)

    # Hoisted final FC: (N*T, H) @ (H, V), parallel grid, vocab-tiled columns.
    V = params["w_fc_t"].shape[1]
    logits = matmul_bias(h_top[:N].reshape(N * T, HIDDEN),
                         params["w_fc_t"], params["b_fc"]).reshape(N, T, V)

    return logits, (hN, cN)


# ----------------------------------------------------------------------------
# Parameters & pure-JAX reference
# ----------------------------------------------------------------------------
def make_params(key, vocab_size):
    """Deterministic synthetic parameters with PyTorch-equivalent shapes.

    Returns (kernel_params, ref_params): kernel_params holds the pre-transposed
    bf16 layouts the kernels consume; ref_params holds per-layer f32 transposed
    weights used by the independent pure-JAX reference.
    """
    ks = jax.random.split(key, 4 + 4 * NUM_LAYERS)
    scale = 1.0 / jnp.sqrt(HIDDEN)
    embedding = jax.random.normal(ks[0], (vocab_size, EMBED), jnp.float32)

    w_ih_t, w_hh_t, b = [], [], []
    for l in range(NUM_LAYERS):
        k0, k1, k2, k3 = ks[4 + 4 * l: 8 + 4 * l]
        w_ih = jax.random.uniform(k0, (4 * HIDDEN, EMBED), jnp.float32,
                                  -scale, scale)
        w_hh = jax.random.uniform(k1, (4 * HIDDEN, HIDDEN), jnp.float32,
                                  -scale, scale)
        b_ih = jax.random.uniform(k2, (4 * HIDDEN,), jnp.float32, -scale, scale)
        b_hh = jax.random.uniform(k3, (4 * HIDDEN,), jnp.float32, -scale, scale)
        w_ih_t.append(w_ih.T)           # (E, 4H)
        w_hh_t.append(w_hh.T)           # (H, 4H)
        b.append(b_ih + b_hh)
    w_fc = jax.random.uniform(ks[1], (vocab_size, HIDDEN), jnp.float32,
                              -scale, scale)
    b_fc = jax.random.uniform(ks[2], (vocab_size,), jnp.float32, -scale, scale)

    ref_params = {
        "embedding": embedding,
        "w_ih_t": jnp.stack(w_ih_t),
        "w_hh_t": jnp.stack(w_hh_t),
        "b": jnp.stack(b),
        "w_fc_t": w_fc.T,
        "b_fc": b_fc.reshape(1, vocab_size),
    }
    kernel_params = {
        "embedding": embedding,
        "w_ih0_t": w_ih_t[0].astype(jnp.bfloat16),               # (E, 4H)
        "b0": b[0].reshape(1, 4 * HIDDEN),                       # (1, 4H) f32
        "w_hh0_t": w_hh_t[0].astype(jnp.bfloat16),               # (H, 4H)
        "w_ih_t": jnp.stack(w_ih_t[1:]).astype(jnp.bfloat16),    # (L-1, H, 4H)
        "w_hh_t": jnp.stack(w_hh_t[1:]).astype(jnp.bfloat16),    # (L-1, H, 4H)
        "b_hi": jnp.stack([b[l].reshape(1, 4 * HIDDEN)
                           for l in range(1, NUM_LAYERS)]),      # (L-1, 1, 4H) f32
        "w_fc_t": w_fc.T.astype(jnp.bfloat16),                   # (H, V)
        "b_fc": b_fc.reshape(1, vocab_size),                     # (1, V) f32
    }
    return kernel_params, ref_params


def reference_forward(x, prev_state, params, sequence_length):
    """Pure-JAX f32 reference mirroring the PyTorch semantics (eval mode)."""
    h0, c0 = prev_state
    N, L = x.shape
    if L < sequence_length:
        x = jnp.pad(x, ((0, 0), (sequence_length - L, 0)))
    elif L > sequence_length:
        x = x[:, -sequence_length:]
    embed = jnp.take(params["embedding"], x, axis=0).astype(jnp.float32)

    h = [h0[l] for l in range(NUM_LAYERS)]
    c = [c0[l] for l in range(NUM_LAYERS)]
    outs = []
    for t in range(N):
        xt = embed[t]
        for l in range(NUM_LAYERS):
            gates = (xt @ params["w_ih_t"][l] + h[l] @ params["w_hh_t"][l]
                     + params["b"][l][None, :])
            i = jax.nn.sigmoid(gates[:, 0 * HIDDEN:1 * HIDDEN])
            f = jax.nn.sigmoid(gates[:, 1 * HIDDEN:2 * HIDDEN])
            g = jnp.tanh(gates[:, 2 * HIDDEN:3 * HIDDEN])
            o = jax.nn.sigmoid(gates[:, 3 * HIDDEN:4 * HIDDEN])
            c[l] = f * c[l] + i * g
            h[l] = o * jnp.tanh(c[l])
            xt = h[l]
        outs.append(xt @ params["w_fc_t"] + params["b_fc"])
    logits = jnp.stack(outs)
    return logits, (jnp.stack(h), jnp.stack(c))


if __name__ == "__main__":
    vocab_size = 128
    sequence_length = 8
    n_steps = 6

    key = jax.random.PRNGKey(0)
    k_par, k_x = jax.random.split(key)
    params, ref_params = make_params(k_par, vocab_size)

    # x has fewer columns than sequence_length to exercise the pad branch.
    x = jax.random.randint(k_x, (n_steps, 5), 0, vocab_size, jnp.int32)
    h0 = jnp.zeros((NUM_LAYERS, sequence_length, HIDDEN), jnp.float32)
    c0 = jnp.zeros((NUM_LAYERS, sequence_length, HIDDEN), jnp.float32)

    fwd = functools.partial(lstm_model_forward, params=params,
                            sequence_length=sequence_length)
    logits, (hN, cN) = jax.block_until_ready(fwd(x, (h0, c0)))

    ref_logits, (ref_h, ref_c) = reference_forward(x, (h0, c0), ref_params,
                                                   sequence_length)
    assert logits.shape == (n_steps, sequence_length, vocab_size)
    assert hN.shape == (NUM_LAYERS, sequence_length, HIDDEN)
    assert cN.shape == (NUM_LAYERS, sequence_length, HIDDEN)
    # bf16 MXU operands (f32 accumulation) => loosened tolerance vs f32 reference.
    assert jnp.allclose(logits, ref_logits, atol=5e-2, rtol=5e-2)
    assert jnp.allclose(hN, ref_h, atol=5e-2, rtol=5e-2)
    assert jnp.allclose(cN, ref_c, atol=5e-2, rtol=5e-2)

    print("KERNEL_OK")
</pallas_src>

<mosaic_0001>
module attributes {stable_mosaic.version = 11 : i64} {
  func.func @_matmul_bias_kernel(%arg0: i32, %arg1: i32, %arg2: memref<48x128xbf16, #tpu.memory_space<vmem>>, %arg3: memref<128x512xbf16, #tpu.memory_space<vmem>>, %arg4: memref<1x512xf32, #tpu.memory_space<vmem>>, %arg5: memref<48x512xf32, #tpu.memory_space<vmem>>) attributes {dimension_semantics = [#tpu.dimension_semantics<parallel>, #tpu.dimension_semantics<parallel>], iteration_bounds = array<i64: 1, 1>, scalar_prefetch = 0 : i64, scratch_operands = 0 : i64, tpu.core_type = #tpu.core_type<tc>, window_params = [{transform_indices = @transform_0, window_bounds = array<i64: 48, 128>}, {transform_indices = @transform_1, window_bounds = array<i64: 128, 512>}, {transform_indices = @transform_2, window_bounds = array<i64: 1, 512>}, {transform_indices = @transform_3, window_bounds = array<i64: 48, 512>}]} {
    %c0 = arith.constant 0 : index
    %c0_0 = arith.constant 0 : index
    %0 = vector.load %arg2[%c0, %c0_0] : memref<48x128xbf16, #tpu.memory_space<vmem>>, vector<48x128xbf16>
    %c0_1 = arith.constant 0 : index
    %c0_2 = arith.constant 0 : index
    %1 = vector.load %arg3[%c0_1, %c0_2] : memref<128x512xbf16, #tpu.memory_space<vmem>>, vector<128x512xbf16>
    %cst = arith.constant dense<0.000000e+00> : vector<48x512xf32>
    %2 = tpu.matmul %0, %1, %cst {dimension_numbers = #tpu.dot_dimension_numbers<[1], [0], [0], [1], [0, 0, 1, 1], [], []>} : vector<48x128xbf16>, vector<128x512xbf16>, vector<48x512xf32> -> vector<48x512xf32>
    %c0_3 = arith.constant 0 : index
    %c0_4 = arith.constant 0 : index
    %3 = vector.load %arg4[%c0_3, %c0_4] : memref<1x512xf32, #tpu.memory_space<vmem>>, vector<1x512xf32>
    %4 = vector.broadcast %3 : vector<1x512xf32> to vector<48x512xf32>
    %5 = arith.addf %2, %4 : vector<48x512xf32>
    %c0_5 = arith.constant 0 : index
    %c0_6 = arith.constant 0 : index
    %6 = vector.load %arg5[%c0_5, %c0_6] : memref<48x512xf32, #tpu.memory_space<vmem>>, vector<48x512xf32>
    tpu.vector_store %arg5[%c0_5, %c0_6], %5 {strides = array<i32>} : memref<48x512xf32, #tpu.memory_space<vmem>>, vector<48x512xf32>,
    return
  }
  func.func @transform_0(%arg0: i32, %arg1: i32) -> (i32, i32) {
    %c0_i32 = arith.constant 0 : i32
    %c0_i32_0 = arith.constant 0 : i32
    return %arg0, %c0_i32 : i32, i32
  }
  func.func @transform_1(%arg0: i32, %arg1: i32) -> (i32, i32) {
    %c0_i32 = arith.constant 0 : i32
    %c0_i32_0 = arith.constant 0 : i32
    return %c0_i32, %arg1 : i32, i32
  }
  func.func @transform_2(%arg0: i32, %arg1: i32) -> (i32, i32) {
    %c0_i32 = arith.constant 0 : i32
    %c0_i32_0 = arith.constant 0 : i32
    return %c0_i32, %arg1 : i32, i32
  }
  func.func @transform_3(%arg0: i32, %arg1: i32) -> (i32, i32) {
    %c0_i32 = arith.constant 0 : i32
    return %arg0, %arg1 : i32, i32
  }
}

</mosaic_0001>

<llo_original>
// kernel: tpu_custom_call.1
$region0: #{tpu_custom_call.1}
  #allocation0 [shape = 'u32[]', space=smem, size = 0x4, offset = 0x4, fixed_abs, tag = 'smem constant byte address 0x4 - core index']
  #allocation1 [shape = 'u32[72,128]{1,0:T(1,128)}', space=vmem, size = 0x9000, scoped, tag = 'internal scratch']
  %s0 = inlined_call_operand.hbm [shape: bf16[48,128], index: 0, kind: input, shape index: {}]
  %s1 = inlined_call_operand.hbm [shape: bf16[128,512], index: 1, kind: input, shape index: {}]
  %s2 = inlined_call_operand.hbm [shape: f32[1,512], index: 2, kind: input, shape index: {}]
  %s3 = inlined_call_operand.hbm [shape: f32[48,512], index: 3, kind: output, shape index: {}]
  %s4 = sld [smem:[#allocation0]]
  $region34: #{tpu_custom_call.1} parent=0
    _
  %s6 = ssub.s32 1, %s4
  %s7 = scalar_select 0, %s6, %s4
  $region1: #{tpu_custom_call.1} parent=0
    #allocation2 [shape = 'u8[12288]{0}', space=vmem, size = 0x3000, scoped, tag = 'input window, operand 0, single buffered']
    #allocation3 [shape = 's32[1]{0}', space=sflag, size = 0x4, scoped, tag = 'scoped memory for tpu_custom_call.1']
    #allocation4 [shape = 's32[1]{0}', space=sflag, size = 0x4, scoped, tag = 'scoped memory for tpu_custom_call.1']
    #allocation5 [shape = 'u8[131072]{0}', space=vmem, size = 0x20000, scoped, tag = 'input window, operand 1, single buffered']
    #allocation6 [shape = 's32[1]{0}', space=sflag, size = 0x4, scoped, tag = 'scoped memory for tpu_custom_call.1']
    #allocation7 [shape = 'u8[2048]{0}', space=vmem, size = 0x800, scoped, tag = 'input window, operand 2, single buffered']
    #allocation8 [shape = 'u8[98304]{0}', space=vmem, size = 0x18000, scoped, tag = 'output window, operand 0, single buffered']
    %8 = vsyncpa [#allocation3], 0
    %9 = vsyncpa [#allocation6], 0
    %10 = vsyncpa [#allocation4], 0
    // Predicated region
    $region2: #{tpu_custom_call.1} parent=1 // pred_check
      _
    $region3: #{tpu_custom_call.1} parent=1 // pred_check_branch
      %12 = sbr.rel (0) target = $region5
    $region4: #{tpu_custom_call.1} parent=1 // pred_region
      %14 = vsyncadd [#allocation3], 0
      %s15 = sshll.u32 %s0, 4
      %s16 = int_to_ptr.hbm [resolvable:$true] %s15
      %s17 = sshll.u32 [#allocation2], 4
      %s18 = int_to_ptr.vmem [resolvable:$true] %s17
      %23 = dma.hbm_to_vmem [thread:$0]  %s16, 384, %s18, [#allocation3], 64, 64, 4
    $region5: #{tpu_custom_call.1} parent=1 // pred_fallthru
      _
    // Predicated region
    $region6: #{tpu_custom_call.1} parent=1 // pred_check
      _
    $region7: #{tpu_custom_call.1} parent=1 // pred_check_branch
      %25 = sbr.rel (0) target = $region9
    $region8: #{tpu_custom_call.1} parent=1 // pred_region
      %27 = vsyncadd [#allocation6], 0
      %s28 = sshll.u32 %s1, 4
      %s29 = int_to_ptr.hbm [resolvable:$true] %s28
      %s30 = sshll.u32 [#allocation5], 4
      %s31 = int_to_ptr.vmem [resolvable:$true] %s30
      %36 = dma.hbm_to_vmem [thread:$0]  %s29, 4096, %s31, [#allocation6], 256, 256, 16
    $region9: #{tpu_custom_call.1} parent=1 // pred_fallthru
      _
    // Predicated region
    $region10: #{tpu_custom_call.1} parent=1 // pred_check
      _
    $region11: #{tpu_custom_call.1} parent=1 // pred_check_branch
      %38 = sbr.rel (0) target = $region13
    $region12: #{tpu_custom_call.1} parent=1 // pred_region
      %40 = vsyncadd [#allocation6], 0
      %s42 = sshll.u32 %s2, 4
      %s43 = int_to_ptr.hbm [resolvable:$true] %s42
      %s44 = sshll.u32 [#allocation7], 4
      %s45 = int_to_ptr.vmem [resolvable:$true] %s44
      %47 = dma.hbm_to_vmem [thread:$0]  %s43, 64, %s45, [#allocation6]
    $region13: #{tpu_custom_call.1} parent=1 // pred_fallthru
      _
    // Predicated region
    $region14: #{tpu_custom_call.1} parent=1 // pred_check
      _
    $region15: #{tpu_custom_call.1} parent=1 // pred_check_branch
      %49 = sbr.rel (0) target = $region17
    $region16: #{tpu_custom_call.1} parent=1 // pred_region
      %51 = dma.done [#allocation3], 384
    $region17: #{tpu_custom_call.1} parent=1 // pred_fallthru
      _
    // Predicated region
    $region18: #{tpu_custom_call.1} parent=1 // pred_check
      _
    $region19: #{tpu_custom_call.1} parent=1 // pred_check_branch
      %53 = sbr.rel (0) target = $region21
    $region20: #{tpu_custom_call.1} parent=1 // pred_region
      %55 = dma.done [#allocation6], 4096
    $region21: #{tpu_custom_call.1} parent=1 // pred_fallthru
      _
    // Predicated region
    $region22: #{tpu_custom_call.1} parent=1 // pred_check
      _
    $region23: #{tpu_custom_call.1} parent=1 // pred_check_branch
      %57 = sbr.rel (0) target = $region25
    $region24: #{tpu_custom_call.1} parent=1 // pred_region
      %59 = dma.done [#allocation6], 64
    $region25: #{tpu_custom_call.1} parent=1 // pred_fallthru
      _
    %v60 = vld [vmem:[#allocation2] sm:$0xf]
    %v61 = vld [vmem:[#allocation2 + $0x4] sm:$0xf]
    %v62 = vld [vmem:[#allocation2 + $0x8] sm:$0xf]
    %v63 = vld [vmem:[#allocation2 + $0xc] sm:$0xf]
    %v64 = vld [vmem:[#allocation2 + $0x10] sm:$0xf]
    %v65 = vld [vmem:[#allocation2 + $0x14] sm:$0xf]
    %v66 = vld [vmem:[#allocation5] sm:$0xff]
    %v67 = vld [vmem:[#allocation5 + $0x8] sm:$0xff]
    %v68 = vld [vmem:[#allocation5 + $0x10] sm:$0xff]
    %v69 = vld [vmem:[#allocation5 + $0x18] sm:$0xff]
    %v70 = vld [vmem:[#allocation5 + $0x20] sm:$0xff]
    %v71 = vld [vmem:[#allocation5 + $0x28] sm:$0xff]
    %v72 = vld [vmem:[#allocation5 + $0x30] sm:$0xff]
    %v73 = vld [vmem:[#allocation5 + $0x38] sm:$0xff]
    %v74 = vld [vmem:[#allocation5 + $0x40] sm:$0xff]
    %v75 = vld [vmem:[#allocation5 + $0x48] sm:$0xff]
    %v76 = vld [vmem:[#allocation5 + $0x50] sm:$0xff]
    %v77 = vld [vmem:[#allocation5 + $0x58] sm:$0xff]
    %v78 = vld [vmem:[#allocation5 + $0x60] sm:$0xff]
    %v79 = vld [vmem:[#allocation5 + $0x68] sm:$0xff]
    %v80 = vld [vmem:[#allocation5 + $0x70] sm:$0xff]
    %v81 = vld [vmem:[#allocation5 + $0x78] sm:$0xff]
    %v82 = vld [vmem:[#allocation5 + $0x80] sm:$0xff]
    %v83 = vld [vmem:[#allocation5 + $0x88] sm:$0xff]
    %v84 = vld [vmem:[#allocation5 + $0x90] sm:$0xff]
    %v85 = vld [vmem:[#allocation5 + $0x98] sm:$0xff]
    %v86 = vld [vmem:[#allocation5 + $0xa0] sm:$0xff]
    %v87 = vld [vmem:[#allocation5 + $0xa8] sm:$0xff]
    %v88 = vld [vmem:[#allocation5 + $0xb0] sm:$0xff]
    %v89 = vld [vmem:[#allocation5 + $0xb8] sm:$0xff]
    %v90 = vld [vmem:[#allocation5 + $0xc0] sm:$0xff]
    %v91 = vld [vmem:[#allocation5 + $0xc8] sm:$0xff]
    %v92 = vld [vmem:[#allocation5 + $0xd0] sm:$0xff]
    %v93 = vld [vmem:[#allocation5 + $0xd8] sm:$0xff]
    %v94 = vld [vmem:[#allocation5 + $0xe0] sm:$0xff]
    %v95 = vld [vmem:[#allocation5 + $0xe8] sm:$0xff]
    %v96 = vld [vmem:[#allocation5 + $0xf0] sm:$0xff]
    %v97 = vld [vmem:[#allocation5 + $0xf8] sm:$0xff]
    %v98 = vld [vmem:[#allocation7] sm:$0xf]
    %v100 = vperm.slane %v98, 0
    %v101 = vperm.slane %v98, 1
    %v102 = vperm.slane %v98, 2
    %v103 = vperm.slane %v98, 3
    %v114 = vunpack.c.l.b16 %v60
    %v115 = vunpack.c.l.b16 %v61
    %v116 = vunpack.c.l.b16 %v62
    %v117 = vunpack.c.l.b16 %v63
    %v118 = vunpack.c.l.b16 %v64
    %v119 = vunpack.c.l.b16 %v65
    %v120 = vpack.c.b16 %v115, %v114
    %v121 = vpack.c.b16 %v117, %v116
    %v122 = vpack.c.b16 %v119, %v118
    %v158 = vunpack.c.l.b16 %v66
    %v159 = vunpack.c.h.b16 %v66
    %v160 = vunpack.c.l.b16 %v67
    %v161 = vunpack.c.h.b16 %v67
    %v162 = vunpack.c.l.b16 %v68
    %v163 = vunpack.c.h.b16 %v68
    %v164 = vunpack.c.l.b16 %v69
    %v165 = vunpack.c.h.b16 %v69
    %v166 = vunpack.c.l.b16 %v70
    %v167 = vunpack.c.h.b16 %v70
    %v168 = vunpack.c.l.b16 %v71
    %v169 = vunpack.c.h.b16 %v71
    %v170 = vunpack.c.l.b16 %v72
    %v171 = vunpack.c.h.b16 %v72
    %v172 = vunpack.c.l.b16 %v73
    %v173 = vunpack.c.h.b16 %v73
    %v174 = vunpack.c.l.b16 %v74
    %v175 = vunpack.c.h.b16 %v74
    %v176 = vunpack.c.l.b16 %v75
    %v177 = vunpack.c.h.b16 %v75
    %v178 = vunpack.c.l.b16 %v76
    %v179 = vunpack.c.h.b16 %v76
    %v180 = vunpack.c.l.b16 %v77
    %v181 = vunpack.c.h.b16 %v77
    %v182 = vunpack.c.l.b16 %v78
    %v183 = vunpack.c.h.b16 %v78
    %v184 = vunpack.c.l.b16 %v79
    %v185 = vunpack.c.h.b16 %v79
    %v186 = vunpack.c.l.b16 %v80
    %v187 = vunpack.c.h.b16 %v80
    %v188 = vunpack.c.l.b16 %v81
    %v189 = vunpack.c.h.b16 %v81
    %v190 = vunpack.c.l.b16 %v82
    %v191 = vunpack.c.h.b16 %v82
    %v192 = vunpack.c.l.b16 %v83
    %v193 = vunpack.c.h.b16 %v83
    %v194 = vunpack.c.l.b16 %v84
    %v195 = vunpack.c.h.b16 %v84
    %v196 = vunpack.c.l.b16 %v85
    %v197 = vunpack.c.h.b16 %v85
    %v198 = vunpack.c.l.b16 %v86
    %v199 = vunpack.c.h.b16 %v86
    %v200 = vunpack.c.l.b16 %v87
    %v201 = vunpack.c.h.b16 %v87
    %v202 = vunpack.c.l.b16 %v88
    %v203 = vunpack.c.h.b16 %v88
    %v204 = vunpack.c.l.b16 %v89
    %v205 = vunpack.c.h.b16 %v89
    %v206 = vunpack.c.l.b16 %v90
    %v207 = vunpack.c.h.b16 %v90
    %v208 = vunpack.c.l.b16 %v91
    %v209 = vunpack.c.h.b16 %v91
    %v210 = vunpack.c.l.b16 %v92
    %v211 = vunpack.c.h.b16 %v92
    %v212 = vunpack.c.l.b16 %v93
    %v213 = vunpack.c.h.b16 %v93
    %v214 = vunpack.c.l.b16 %v94
    %v215 = vunpack.c.h.b16 %v94
    %v216 = vunpack.c.l.b16 %v95
    %v217 = vunpack.c.h.b16 %v95
    %v218 = vunpack.c.l.b16 %v96
    %v219 = vunpack.c.h.b16 %v96
    %v220 = vunpack.c.l.b16 %v97
    %v221 = vunpack.c.h.b16 %v97
    %v222 = vpack.c.b16 %v162, %v158
    %v223 = vpack.c.b16 %v163, %v159
    %v224 = vpack.c.b16 %v164, %v160
    %v225 = vpack.c.b16 %v165, %v161
    %v226 = vpack.c.b16 %v170, %v166
    %v227 = vpack.c.b16 %v171, %v167
    %v228 = vpack.c.b16 %v172, %v168
    %v229 = vpack.c.b16 %v173, %v169
    %v230 = vpack.c.b16 %v178, %v174
    %v231 = vpack.c.b16 %v179, %v175
    %v232 = vpack.c.b16 %v180, %v176
    %v233 = vpack.c.b16 %v181, %v177
    %v234 = vpack.c.b16 %v186, %v182
    %v235 = vpack.c.b16 %v187, %v183
    %v236 = vpack.c.b16 %v188, %v184
    %v237 = vpack.c.b16 %v189, %v185
    %v238 = vpack.c.b16 %v194, %v190
    %v239 = vpack.c.b16 %v195, %v191
    %v240 = vpack.c.b16 %v196, %v192
    %v241 = vpack.c.b16 %v197, %v193
    %v242 = vpack.c.b16 %v202, %v198
    %v243 = vpack.c.b16 %v203, %v199
    %v244 = vpack.c.b16 %v204, %v200
    %v245 = vpack.c.b16 %v205, %v201
    %v246 = vpack.c.b16 %v210, %v206
    %v247 = vpack.c.b16 %v211, %v207
    %v248 = vpack.c.b16 %v212, %v208
    %v249 = vpack.c.b16 %v213, %v209
    %v250 = vpack.c.b16 %v218, %v214
    %v251 = vpack.c.b16 %v219, %v215
    %v252 = vpack.c.b16 %v220, %v216
    %v253 = vpack.c.b16 %v221, %v217
    %286 = vmatpush.bf16.msra.mxu0 %v250
    %287 = vmatpush.bf16.msra.mxu0 %v246
    %288 = vmatpush.bf16.msra.mxu0 %v242
    %289 = vmatpush.bf16.msra.mxu0 %v238
    %290 = vmatpush.bf16.msra.mxu0 %v234
    %291 = vmatpush.bf16.msra.mxu0 %v230
    %292 = vmatpush.bf16.msra.mxu0 %v226
    %293 = vmatpush.bf16.msra.mxu0 %v222
    %294 = vmatmul.bf16.gmra.mxu0 %v120
    %v295 = vpop.f32.mrf.mxu0
    %v296 = vadd.f32 %v100, %v295
    %v297 = vpop.f32.mrf.mxu0
    %v298 = vadd.f32 %v100, %v297
    %299 = vmatmul.bf16.gmra.mxu0 %v121
    %v300 = vpop.f32.mrf.mxu0
    %v301 = vadd.f32 %v100, %v300
    %v302 = vpop.f32.mrf.mxu0
    %v303 = vadd.f32 %v100, %v302
    %304 = vmatmul.bf16.gmra.mxu0 %v122
    %v305 = vpop.f32.mrf.mxu0
    %v306 = vadd.f32 %v100, %v305
    %v307 = vpop.f32.mrf.mxu0
    %v308 = vadd.f32 %v100, %v307
    %309 = vdwg.mxu0
    %310 = vmatpush.bf16.msra.mxu0 %v251
    %311 = vmatpush.bf16.msra.mxu0 %v247
    %312 = vmatpush.bf16.msra.mxu0 %v243
    %313 = vmatpush.bf16.msra.mxu0 %v239
    %314 = vmatpush.bf16.msra.mxu0 %v235
    %315 = vmatpush.bf16.msra.mxu0 %v231
    %316 = vmatpush.bf16.msra.mxu0 %v227
    %317 = vmatpush.bf16.msra.mxu0 %v223
    %318 = vmatmul.bf16.gmra.mxu0 %v120
    %v319 = vpop.f32.mrf.mxu0
    %v320 = vadd.f32 %v101, %v319
    %v321 = vpop.f32.mrf.mxu0
    %v322 = vadd.f32 %v101, %v321
    %323 = vmatmul.bf16.gmra.mxu0 %v121
    %v324 = vpop.f32.mrf.mxu0
    %v325 = vadd.f32 %v101, %v324
    %v326 = vpop.f32.mrf.mxu0
    %v327 = vadd.f32 %v101, %v326
    %328 = vmatmul.bf16.gmra.mxu0 %v122
    %v329 = vpop.f32.mrf.mxu0
    %v330 = vadd.f32 %v101, %v329
    %v331 = vpop.f32.mrf.mxu0
    %v332 = vadd.f32 %v101, %v331
    %333 = vdwg.mxu0
    %334 = vmatpush.bf16.msra.mxu0 %v252
    %335 = vmatpush.bf16.msra.mxu0 %v248
    %336 = vmatpush.bf16.msra.mxu0 %v244
    %337 = vmatpush.bf16.msra.mxu0 %v240
    %338 = vmatpush.bf16.msra.mxu0 %v236
    %339 = vmatpush.bf16.msra.mxu0 %v232
    %340 = vmatpush.bf16.msra.mxu0 %v228
    %341 = vmatpush.bf16.msra.mxu0 %v224
    %342 = vmatmul.bf16.gmra.mxu0 %v120
    %v343 = vpop.f32.mrf.mxu0
    %v344 = vadd.f32 %v102, %v343
    %v345 = vpop.f32.mrf.mxu0
    %v346 = vadd.f32 %v102, %v345
    %347 = vmatmul.bf16.gmra.mxu0 %v121
    %v348 = vpop.f32.mrf.mxu0
    %v349 = vadd.f32 %v102, %v348
    %v350 = vpop.f32.mrf.mxu0
    %v351 = vadd.f32 %v102, %v350
    %352 = vmatmul.bf16.gmra.mxu0 %v122
    %v353 = vpop.f32.mrf.mxu0
    %v354 = vadd.f32 %v102, %v353
    %v355 = vpop.f32.mrf.mxu0
    %v356 = vadd.f32 %v102, %v355
    %357 = vdwg.mxu0
    %358 = vmatpush.bf16.msra.mxu0 %v253
    %359 = vmatpush.bf16.msra.mxu0 %v249
    %360 = vmatpush.bf16.msra.mxu0 %v245
    %361 = vmatpush.bf16.msra.mxu0 %v241
    %362 = vmatpush.bf16.msra.mxu0 %v237
    %363 = vmatpush.bf16.msra.mxu0 %v233
    %364 = vmatpush.bf16.msra.mxu0 %v229
    %365 = vmatpush.bf16.msra.mxu0 %v225
    %366 = vmatmul.bf16.gmra.mxu0 %v120
    %v367 = vpop.f32.mrf.mxu0
    %v368 = vadd.f32 %v103, %v367
    %v369 = vpop.f32.mrf.mxu0
    %v370 = vadd.f32 %v103, %v369
    %371 = vmatmul.bf16.gmra.mxu0 %v121
    %v372 = vpop.f32.mrf.mxu0
    %v373 = vadd.f32 %v103, %v372
    %v374 = vpop.f32.mrf.mxu0
    %v375 = vadd.f32 %v103, %v374
    %376 = vmatmul.bf16.gmra.mxu0 %v122
    %v377 = vpop.f32.mrf.mxu0
    %v378 = vadd.f32 %v103, %v377
    %v379 = vpop.f32.mrf.mxu0
    %v380 = vadd.f32 %v103, %v379
    %381 = vdwg.mxu0
    %382 = vst [vmem:[#allocation8] sm:$0xff] %v296
    %383 = vst [vmem:[#allocation8 + $0x8] sm:$0xff] %v320
    %384 = vst [vmem:[#allocation8 + $0x10] sm:$0xff] %v344
    %385 = vst [vmem:[#allocation8 + $0x18] sm:$0xff] %v368
    %386 = vst [vmem:[#allocation8 + $0x20] sm:$0xff] %v298
    %387 = vst [vmem:[#allocation8 + $0x28] sm:$0xff] %v322
    %388 = vst [vmem:[#allocation8 + $0x30] sm:$0xff] %v346
    %389 = vst [vmem:[#allocation8 + $0x38] sm:$0xff] %v370
    %390 = vst [vmem:[#allocation8 + $0x40] sm:$0xff] %v301
    %391 = vst [vmem:[#allocation8 + $0x48] sm:$0xff] %v325
    %392 = vst [vmem:[#allocation8 + $0x50] sm:$0xff] %v349
    %393 = vst [vmem:[#allocation8 + $0x58] sm:$0xff] %v373
    %394 = vst [vmem:[#allocation8 + $0x60] sm:$0xff] %v303
    %395 = vst [vmem:[#allocation8 + $0x68] sm:$0xff] %v327
    %396 = vst [vmem:[#allocation8 + $0x70] sm:$0xff] %v351
    %397 = vst [vmem:[#allocation8 + $0x78] sm:$0xff] %v375
    %398 = vst [vmem:[#allocation8 + $0x80] sm:$0xff] %v306
    %399 = vst [vmem:[#allocation8 + $0x88] sm:$0xff] %v330
    %400 = vst [vmem:[#allocation8 + $0x90] sm:$0xff] %v354
    %401 = vst [vmem:[#allocation8 + $0x98] sm:$0xff] %v378
    %402 = vst [vmem:[#allocation8 + $0xa0] sm:$0xff] %v308
    %403 = vst [vmem:[#allocation8 + $0xa8] sm:$0xff] %v332
    %404 = vst [vmem:[#allocation8 + $0xb0] sm:$0xff] %v356
    %405 = vst [vmem:[#allocation8 + $0xb8] sm:$0xff] %v380
    // Predicated region
    $region26: #{tpu_custom_call.1} parent=1 // pred_check
      _
    $region27: #{tpu_custom_call.1} parent=1 // pred_check_branch
      %407 = sbr.rel (0) target = $region29
    $region28: #{tpu_custom_call.1} parent=1 // pred_region
      %409 = vsyncadd [#allocation4], 0
      %s410 = sshll.u32 [#allocation8], 4
      %s411 = int_to_ptr.vmem [resolvable:$true] %s410
      %s412 = sshll.u32 %s3, 4
      %s413 = int_to_ptr.hbm [resolvable:$true] %s412
      %418 = dma.vmem_to_hbm [thread:$0]  %s411, 3072, %s413, [#allocation4], 512, 512, 32
    $region29: #{tpu_custom_call.1} parent=1 // pred_fallthru
      _
    // Predicated region
    $region30: #{tpu_custom_call.1} parent=1 // pred_check
      _
    $region31: #{tpu_custom_call.1} parent=1 // pred_check_branch
      %420 = sbr.rel (0) target = $region33
    $region32: #{tpu_custom_call.1} parent=1 // pred_region
      %422 = dma.done [#allocation4], 3072
    $region33: #{tpu_custom_call.1} parent=1 // pred_fallthru
      _
    %423 = vsyncpa [#allocation3], 1
    %424 = vsyncpa [#allocation6], 1
    %425 = vsyncpa [#allocation4], 1

</llo_original>
